<compile_context>
chip_gen: v6e
topology: v6e:2x2x1
jax: 0.10.0
libtpu: 0.0.40
codegen_flags: <defaults>
</compile_context>

<pallas_src>
import functools

import jax
import jax.numpy as jnp
from jax.experimental import pallas as pl
from jax.experimental.pallas import tpu as pltpu

_LANES = 128
_SUBLANES = 8
_SOFTPLUS_THRESHOLD = 20.0


def _mish_kernel(x_ref, o_ref):
    # I/O in the original dtype; math in f32 (important for bf16 inputs).
    x = x_ref[...].astype(jnp.float32)
    # tanh(softplus(x)) == w / (w + 2) with w = e*(e+2), e = exp(x).
    # For x > 20 torch's softplus is linear and tanh(x) == 1 in f32 -> mish(x) == x.
    e = jnp.exp(jnp.minimum(x, _SOFTPLUS_THRESHOLD))
    w = e * (e + 2.0)
    d = w + 2.0
    r = pl.reciprocal(d, approx=True)      # EUP slot (free in a mem-bound kernel)
    r = r * (2.0 - d * r)                  # one Newton step -> ~f32-exact, VPU only
    y = jnp.where(x > _SOFTPLUS_THRESHOLD, x, x * (w * r))
    o_ref[...] = y.astype(o_ref.dtype)


def _mish_jnp(x):
    # Pure-JAX reference / tiny-input fallback (matches torch softplus thresholding).
    xf = x.astype(jnp.float32)
    sp = jnp.where(xf > _SOFTPLUS_THRESHOLD, xf,
                   jnp.log1p(jnp.exp(jnp.minimum(xf, _SOFTPLUS_THRESHOLD))))
    return (xf * jnp.tanh(sp)).astype(x.dtype)


def _mish_pallas_2d(x2d, tr):
    rows, lanes = x2d.shape
    grid = (pl.cdiv(rows, tr),)
    return pl.pallas_call(
        _mish_kernel,
        out_shape=jax.ShapeDtypeStruct((rows, lanes), x2d.dtype),
        grid_spec=pltpu.PrefetchScalarGridSpec(
            num_scalar_prefetch=0,
            grid=grid,
            in_specs=[pl.BlockSpec((tr, lanes), lambda i: (i, 0))],
            out_specs=pl.BlockSpec((tr, lanes), lambda i: (i, 0)),
        ),
        compiler_params=pltpu.CompilerParams(
            dimension_semantics=("parallel",),
            vmem_limit_bytes=48 * 1024 * 1024,
        ),
    )(x2d)


@functools.partial(jax.jit, static_argnames=("block_bytes", "min_pallas_elems"))
def mish(x, *, block_bytes=2 << 20, min_pallas_elems=1 << 15):
    """Mish (x * tanh(softplus(x))) via a Pallas TPU kernel; any shape / dtype."""
    orig_shape = x.shape
    orig_dtype = x.dtype
    n = x.size
    if n == 0:
        return x
    # Tiny inputs: launch/layout overhead dominates -> plain jnp.
    if n < min_pallas_elems:
        return _mish_jnp(x)

    chunk = _SUBLANES * _LANES  # 1024-element alignment for the (rows, 128) slab
    x_flat = jnp.ravel(x)
    padded = n
    if n % chunk != 0:
        # Misaligned tail only: pad (one extra copy) and slice back afterwards.
        padded = ((n + chunk - 1) // chunk) * chunk
        x_flat = jnp.pad(x_flat, (0, padded - n))
    rows = padded // _LANES  # multiple of 8 sublanes by construction

    # ~block_bytes per I/O buffer in the ORIGINAL dtype, multiple of 8 sublanes.
    itemsize = jnp.dtype(orig_dtype).itemsize
    tr = max(_SUBLANES, (block_bytes // (_LANES * itemsize) // _SUBLANES) * _SUBLANES)
    tr = min(tr, rows)
    # Keep >= 2 grid steps so both v7x TensorCores stream and the pipeline overlaps.
    if tr >= rows and rows > _SUBLANES:
        tr = max(_SUBLANES, (rows // 2 // _SUBLANES) * _SUBLANES)

    out2d = _mish_pallas_2d(x_flat.reshape(rows, _LANES), tr)

    out_flat = out2d.reshape(-1)
    if padded != n:
        out_flat = out_flat[:n]
    return out_flat.reshape(orig_shape)


if __name__ == "__main__":
    key = jax.random.PRNGKey(0)
    k1, k2, k3, k4 = jax.random.split(key, 4)

    # 1) Module-shaped NCHW input (small) -- force the Pallas path so the kernel runs.
    x1 = jax.random.normal(k1, (2, 4, 16, 16), dtype=jnp.float32) * 3.0
    y1 = mish(x1, min_pallas_elems=0)
    jax.block_until_ready(y1)
    assert y1.shape == x1.shape and y1.dtype == x1.dtype
    assert float(jnp.max(jnp.abs(y1 - _mish_jnp(x1)))) < 1e-3

    # 2) bf16 input: kernel I/O stays bf16, math done in f32 inside the kernel.
    x2 = (jax.random.normal(k2, (2, 8, 32, 32), dtype=jnp.float32) * 3.0).astype(jnp.bfloat16)
    y2 = mish(x2, min_pallas_elems=0)
    jax.block_until_ready(y2)
    assert y2.dtype == jnp.bfloat16
    err2 = jnp.max(jnp.abs(y2.astype(jnp.float32) - _mish_jnp(x2).astype(jnp.float32)))
    assert float(err2) < 1e-1

    # 3) Row count not divisible by the block rows -> exercises the masked final block.
    x3 = jax.random.normal(k3, (2, 4, 30, 64), dtype=jnp.float32) * 3.0
    y3 = mish(x3, min_pallas_elems=0)
    jax.block_until_ready(y3)
    assert float(jnp.max(jnp.abs(y3 - _mish_jnp(x3)))) < 1e-3

    # 4) Ragged element count -> exercises the (misaligned-only) pad/slice path.
    x4 = jax.random.normal(k4, (3, 5, 7, 11), dtype=jnp.float32) * 3.0
    y4 = mish(x4, min_pallas_elems=0)
    jax.block_until_ready(y4)
    assert float(jnp.max(jnp.abs(y4 - _mish_jnp(x4)))) < 1e-3

    print("KERNEL_OK")
</pallas_src>

<mosaic_0001>
module attributes {stable_mosaic.version = 11 : i64} {
  func.func @_mish_kernel(%arg0: i32, %arg1: memref<8x128xf32, #tpu.memory_space<vmem>>, %arg2: memref<8x128xf32, #tpu.memory_space<vmem>>) attributes {dimension_semantics = [#tpu.dimension_semantics<parallel>], iteration_bounds = array<i64: 2>, scalar_prefetch = 0 : i64, scratch_operands = 0 : i64, tpu.core_type = #tpu.core_type<tc>, window_params = [{transform_indices = @transform_0, window_bounds = array<i64: 8, 128>}, {transform_indices = @transform_1, window_bounds = array<i64: 8, 128>}]} {
    %c0 = arith.constant 0 : index
    %c0_0 = arith.constant 0 : index
    %0 = vector.load %arg1[%c0, %c0_0] : memref<8x128xf32, #tpu.memory_space<vmem>>, vector<8x128xf32>
    %cst = arith.constant 2.000000e+01 : f32
    %1 = vector.broadcast %cst : f32 to vector<8x128xf32>
    %2 = arith.minimumf %0, %1 : vector<8x128xf32>
    %3 = math.exp %2 : vector<8x128xf32>
    %cst_1 = arith.constant 2.000000e+00 : f32
    %4 = vector.broadcast %cst_1 : f32 to vector<8x128xf32>
    %5 = arith.addf %3, %4 : vector<8x128xf32>
    %6 = arith.mulf %3, %5 : vector<8x128xf32>
    %cst_2 = arith.constant 2.000000e+00 : f32
    %7 = vector.broadcast %cst_2 : f32 to vector<8x128xf32>
    %8 = arith.addf %6, %7 : vector<8x128xf32>
    %9 = tpu.reciprocal %8 {approx = true} : vector<8x128xf32> -> vector<8x128xf32>
    %10 = arith.mulf %8, %9 : vector<8x128xf32>
    %cst_3 = arith.constant 2.000000e+00 : f32
    %11 = vector.broadcast %cst_3 : f32 to vector<8x128xf32>
    %12 = arith.subf %11, %10 : vector<8x128xf32>
    %13 = arith.mulf %9, %12 : vector<8x128xf32>
    %cst_4 = arith.constant 2.000000e+01 : f32
    %14 = vector.broadcast %cst_4 : f32 to vector<8x128xf32>
    %15 = arith.cmpf ogt, %0, %14 : vector<8x128xf32>
    %16 = arith.mulf %6, %13 : vector<8x128xf32>
    %17 = arith.mulf %0, %16 : vector<8x128xf32>
    %18 = arith.select %15, %0, %17 : vector<8x128xi1>, vector<8x128xf32>
    %c0_5 = arith.constant 0 : index
    %c0_6 = arith.constant 0 : index
    %19 = vector.load %arg2[%c0_5, %c0_6] : memref<8x128xf32, #tpu.memory_space<vmem>>, vector<8x128xf32>
    tpu.vector_store %arg2[%c0_5, %c0_6], %18 {strides = array<i32>} : memref<8x128xf32, #tpu.memory_space<vmem>>, vector<8x128xf32>,
    return
  }
  func.func @transform_0(%arg0: i32) -> (i32, i32) {
    %c0_i32 = arith.constant 0 : i32
    %c0_i32_0 = arith.constant 0 : i32
    return %arg0, %c0_i32 : i32, i32
  }
  func.func @transform_1(%arg0: i32) -> (i32, i32) {
    %c0_i32 = arith.constant 0 : i32
    %c0_i32_0 = arith.constant 0 : i32
    return %arg0, %c0_i32 : i32, i32
  }
}

</mosaic_0001>

<llo_original>
// kernel: mish.1
$region0: #{mish.1}
  #allocation0 [shape = 'u32[]', space=smem, size = 0x4, offset = 0x4, fixed_abs, tag = 'smem constant byte address 0x4 - core index']
  #allocation1 [shape = 'u32[144,128]{1,0:T(1,128)}', space=vmem, size = 0x12000, scoped, tag = 'internal scratch']
  %s0 = inlined_call_operand.vmem [shape: f32[16,128], index: 0, kind: input, shape index: {}]
  %s1 = inlined_call_operand.vmem [shape: f32[16,128], index: 1, kind: output, shape index: {}]
  %s2 = sld [smem:[#allocation0]]
  $region37: #{mish.1} parent=0
    _
  %s4 = ssub.s32 1, %s2
  %s5 = scalar_select 0, %s4, %s2
  loop: start=0, step=1, limit=4
  $region2: #{mish.1} parent=0 // loop_pre_header
    _
  $region3: #{mish.1} parent=0 // loop_header
    %s7 = sphi 0, %s11
    %p8 = scmp.ge.s32.totalorder %s7, 4
    %s17 = sphi 0, %s19
    %s20 = sphi 0, %s17
    %s21 = sphi 0, %s20
    %s37 = sphi 0, %s21
    %s43 = sphi 0, %s45
    %s46 = sphi 0, %s43
    %s47 = sphi 0, %s46
    %s63 = sphi 0, %s47
  $region4: #{mish.1} parent=0 // loop_header_branch
    %10 = sbr.rel (%p8) target = $region8
  $region5: #{mish.1} parent=0 // loop_body
    %s12 = ssub.s32 %s7, 1
    %s13 = ssub.s32 %s7, 2
    %s14 = sadd.s32 %s7, 1
    %s15 = ssub.s32 %s7, %s14
    %p16 = scmp.eq.s32.totalorder %s15, 0
    %s18 = sadd.s32 %s17, 1
    %s19 = scalar_select %p16, %s17, %s18
    %p22 = pneg %p16
    %p23 = scmp.eq.s32.totalorder %s7, 1
    %p24 = por %p22, %p23
    %p25 = scmp.ne.s32.totalorder %s17, %s20
    %p26 = scmp.eq.s32.totalorder %s7, 0
    %p27 = por %p25, %p26
    %p28 = scmp.ne.s32.totalorder %s17, %s20
    %p29 = scmp.eq.s32.totalorder %s12, 1
    %p30 = por %p28, %p29
    %p31 = scmp.ne.s32.totalorder %s20, %s21
    %p32 = scmp.eq.s32.totalorder %s12, 0
    %p33 = por %p31, %p32
    %p34 = scmp.ne.s32.totalorder %s20, %s21
    %p35 = scmp.eq.s32.totalorder %s13, 1
    %p36 = por %p34, %p35
    %p38 = scmp.ne.s32.totalorder %s21, %s37
    %p39 = scmp.eq.s32.totalorder %s13, 0
    %p40 = por %p38, %p39
    %s41 = ssub.s32 %s7, %s14
    %p42 = scmp.eq.s32.totalorder %s41, 0
    %s44 = sadd.s32 %s43, 1
    %s45 = scalar_select %p42, %s43, %s44
    %p48 = pneg %p42
    %p49 = scmp.eq.s32.totalorder %s7, 1
    %p50 = por %p48, %p49
    %p51 = scmp.ne.s32.totalorder %s43, %s46
    %p52 = scmp.eq.s32.totalorder %s7, 0
    %p53 = por %p51, %p52
    %p54 = scmp.ne.s32.totalorder %s43, %s46
    %p55 = scmp.eq.s32.totalorder %s12, 1
    %p56 = por %p54, %p55
    %p57 = scmp.ne.s32.totalorder %s46, %s47
    %p58 = scmp.eq.s32.totalorder %s12, 0
    %p59 = por %p57, %p58
    %p60 = scmp.ne.s32.totalorder %s46, %s47
    %p61 = scmp.eq.s32.totalorder %s13, 1
    %p62 = por %p60, %p61
    %p64 = scmp.ne.s32.totalorder %s47, %s63
    %p65 = scmp.eq.s32.totalorder %s13, 0
    %p66 = por %p64, %p65
    %p67 = scmp.le.s32.totalorder 1, %s7
    %p68 = scmp.lt.s32.totalorder %s7, 3
    %p69 = pnand %p67, %p68
    %p70 = pneg %p69
    // Predicated region
    $region9: #{mish.1} parent=5 // pred_check
      _
    $region10: #{mish.1} parent=5 // pred_check_branch
      %72 = sbr.rel (%p69) target = $region12
    $region11: #{mish.1} parent=5 // pred_region
      %s73 = ssub.s32 %s7, 1
    $region12: #{mish.1} parent=5 // pred_fallthru
      _
    %p74 = scmp.lt.s32.totalorder %s7, 2
    // Predicated region
    $region13: #{mish.1} parent=5 // pred_check
      %p75 = pneg %p74
    $region14: #{mish.1} parent=5 // pred_check_branch
      %77 = sbr.rel (%p75) target = $region16
    $region15: #{mish.1} parent=5 // pred_region
      // Predicated region
      $region17: #{mish.1} parent=15 // pred_check
        %p78 = pneg %p27
      $region18: #{mish.1} parent=15 // pred_check_branch
        %80 = sbr.rel (%p78) target = $region20
      $region19: #{mish.1} parent=15 // pred_region
        %p81 = scmp.lt.s32.totalorder %s7, 1
        %s82 = scalar_select %p81, %s7, 1
        %s83 = smul.addr %s82, 8
        %s84 = scalar_lea.vmem %s0, %s83
      $region20: #{mish.1} parent=15 // pred_fallthru
        _
    $region16: #{mish.1} parent=5 // pred_fallthru
      _
    %p85 = scmp.le.s32.totalorder 1, %s7
    %p86 = scmp.lt.s32.totalorder %s7, 3
    %p87 = pnand %p85, %p86
    %p88 = pneg %p87
    // Predicated region
    $region21: #{mish.1} parent=5 // pred_check
      _
    $region22: #{mish.1} parent=5 // pred_check_branch
      %90 = sbr.rel (%p87) target = $region24
    $region23: #{mish.1} parent=5 // pred_region
      %s91 = ssub.s32 %s7, 1
      %p92 = scmp.lt.s32.totalorder %s12, 1
      %s93 = scalar_select %p92, %s12, 1
      %s94 = smul.addr %s93, 8
      %s95 = scalar_lea.vmem %s0, %s94
      %p96 = pneg %p33
      %p97 = pneg %p30
      %p98 = pneg %p59
      %p99 = pneg %p56
      %p100 = scmp.lt.s32.totalorder %s12, 1
      %s101 = scalar_select %p100, %s12, 1
      %s102 = smul.addr %s101, 8
      %s103 = scalar_lea.vmem %s1, %s102
      %p104 = scmp.lt.s32.totalorder %s12, 1
      %s105 = scalar_select %p104, %s12, 1
      %s106 = smul.addr %s105, 8
      %s107 = scalar_lea.vmem %s0, %s106
      %p108 = scmp.lt.s32.totalorder %s12, 1
      %s109 = scalar_select %p108, %s12, 1
      %s110 = smul.addr %s109, 8
      %s111 = scalar_lea.vmem %s1, %s110
      %v112 = vld [vmem:[%s107] sm:$0xff]
      %v113 = vmin.f32 %v112, 20.0
      %v114 = vmul.f32 %v113, 1.442695
      %v115 = vpow.pop %v114
      %v116 = vadd.f32 %v115, 2.0
      %v117 = vmul.f32 %v115, %v116
      %v118 = vadd.f32 %v117, 2.0
      %v119 = vrcp.pop %v118
      %v120 = vmul.f32 %v118, %v119
      %v121 = vsub.f32 2.0, %v120
      %v122 = vmul.f32 %v119, %v121
      %vm123 = vcmp.gt.f32.partialorder %v112, 20.0
      %v124 = vmul.f32 %v117, %v122
      %v125 = vmul.f32 %v112, %v124
      %v126 = vsel %vm123, %v112, %v125
      %127 = vst [vmem:[%s111] sm:$0xff] %v126
      %p128 = scmp.lt.s32.totalorder %s12, 1
      %s129 = scalar_select %p128, %s12, 1
      %s130 = smul.addr %s129, 8
      %s131 = scalar_lea.vmem %s1, %s130
      // Predicated region
      $region25: #{mish.1} parent=23 // pred_check
        %p132 = pneg %p56
      $region26: #{mish.1} parent=23 // pred_check_branch
        %134 = sbr.rel (%p132) target = $region28
      $region27: #{mish.1} parent=23 // pred_region
        _
      $region28: #{mish.1} parent=23 // pred_fallthru
        _
    $region24: #{mish.1} parent=5 // pred_fallthru
      _
    %p135 = scmp.le.s32.totalorder 2, %s7
    // Predicated region
    $region29: #{mish.1} parent=5 // pred_check
      %p136 = pneg %p135
    $region30: #{mish.1} parent=5 // pred_check_branch
      %138 = sbr.rel (%p136) target = $region32
    $region31: #{mish.1} parent=5 // pred_region
      %s139 = ssub.s32 %s7, 2
      // Predicated region
      $region33: #{mish.1} parent=31 // pred_check
        %p140 = pneg %p62
      $region34: #{mish.1} parent=31 // pred_check_branch
        %142 = sbr.rel (%p140) target = $region36
      $region35: #{mish.1} parent=31 // pred_region
        %p143 = scmp.lt.s32.totalorder %s13, 1
        %s144 = scalar_select %p143, %s13, 1
        %s145 = smul.addr %s144, 8
        %s146 = scalar_lea.vmem %s1, %s145
      $region36: #{mish.1} parent=31 // pred_fallthru
        _
    $region32: #{mish.1} parent=5 // pred_fallthru
      _
  $region6: #{mish.1} parent=0 // loop_footer
    %s11 = sadd.s32 1, %s7
  $region7: #{mish.1} parent=0 // loop_footer_branch
    %6 = sbr.rel target = $region3
  $region8: #{mish.1} parent=0 // loop_exit
    _

</llo_original>
